<compile_context>
chip_gen: v6e
topology: v6e:2x2x1
jax: 0.10.0
libtpu: 0.0.40
codegen_flags: <defaults>
</compile_context>

<pallas_src>
import functools

import jax
import jax.numpy as jnp
from jax.experimental import pallas as pl
from jax.experimental.pallas import tpu as pltpu

SMOOTH = 1e-5
LANE = 128  # TPU lane width


def _round_up(x, m):
    return ((x + m - 1) // m) * m


def _dice_kernel(score_ref, label_ref, inter_ref, y_ref, z_ref, *,
                 n_classes, fuse_softmax):
    """Grid = (N, n_chunks, n_inner).

    score_ref : (1, C, R, 128) f32 — logits/probs, all classes, R rows of 128 px
    label_ref : (1, R, 128)    i32 — integer labels, padding marked with -1
    inter/y/z_ref : (1, 1, C, 128) f32 — per-class, per-lane partial sums,
        accumulated across the inner ("arbitrary") grid axis.
    """
    j = pl.program_id(2)

    lab = label_ref[0]                                  # (R, 128) int32
    s = score_ref[0].astype(jnp.float32)                # (C, R, 128)

    if fuse_softmax:
        # Fused softmax over the class axis (per-pixel normalization).
        m = jnp.max(s, axis=0, keepdims=True)           # elementwise over C slabs
        e = jnp.exp(s - m)                              # EUP
        s = e / jnp.sum(e, axis=0, keepdims=True)
        # Padded pixels (label == -1) would otherwise contribute 1/C to z_sum.
        s = s * (lab >= 0).astype(jnp.float32)[None, :, :]

    inter_parts, y_parts, z_parts = [], [], []
    for i in range(n_classes):                          # static, small loop
        si = s[i]                                       # (R, 128)
        ti = (lab == i).astype(jnp.float32)             # on-the-fly one-hot
        # Reduce over the sublane/row axis only; keep the 128 lanes as partials
        # (final cross-lane reduction happens once, outside the kernel).
        inter_parts.append(jnp.sum(si * ti, axis=0, keepdims=True))
        y_parts.append(jnp.sum(ti, axis=0, keepdims=True))        # t*t == t
        z_parts.append(jnp.sum(si * si, axis=0, keepdims=True))

    inter_upd = jnp.concatenate(inter_parts, axis=0)[None, None]  # (1,1,C,128)
    y_upd = jnp.concatenate(y_parts, axis=0)[None, None]
    z_upd = jnp.concatenate(z_parts, axis=0)[None, None]

    @pl.when(j == 0)
    def _init():
        inter_ref[...] = jnp.zeros_like(inter_ref)
        y_ref[...] = jnp.zeros_like(y_ref)
        z_ref[...] = jnp.zeros_like(z_ref)

    inter_ref[...] += inter_upd
    y_ref[...] += y_upd
    z_ref[...] += z_upd


@functools.partial(jax.jit,
                   static_argnames=("n_classes", "softmax", "block_bytes"))
def dice_loss(inputs, target, n_classes, weight=None, softmax=False,
              block_bytes=1 << 20):
    """Pallas port of DiceLoss.forward.

    inputs : [N, C, H, W] float  (C == n_classes); probabilities, or logits if
             softmax=True (softmax is fused into the kernel).
    target : [N, H, W]    integer class labels
    weight : optional [C] per-class weights (defaults to ones)
    """
    n, c, h, w = inputs.shape
    assert c == n_classes, f"predict C={c} & n_classes={n_classes} do not match"
    hw = h * w

    # Free reshapes — no class-axis transpose, no extra HBM pass.
    score = inputs.reshape(n, c, hw).astype(jnp.float32)
    labels = target.reshape(n, hw).astype(jnp.int32)

    rows = _round_up(hw, LANE) // LANE          # 128-pixel rows per sample

    # Sublane depth per block: multiple of 8, ~block_bytes of score per step.
    tile_rows = max(8, min(2048, (block_bytes // (c * LANE * 4)) // 8 * 8))
    tile_rows = min(tile_rows, _round_up(rows, 8))

    # Row-chunk parallel axis so both v7x TensorCores stay busy when N is small.
    n_chunks = 1 if n >= 2 else max(1, min(2, rows // tile_rows))
    n_inner = -(-rows // (n_chunks * tile_rows))
    hr_pad = n_chunks * n_inner * tile_rows
    hw_pad = hr_pad * LANE

    if hw_pad != hw:
        # Padded scores = 0 (no z_sum contribution without fused softmax);
        # padded labels = -1 (never match a class; also the validity mask
        # used when softmax is fused).  For typical spatial sizes hw is
        # already a multiple of the tile and this pad is skipped entirely.
        score = jnp.pad(score, ((0, 0), (0, 0), (0, hw_pad - hw)))
        labels = jnp.pad(labels, ((0, 0), (0, hw_pad - hw)), constant_values=-1)

    score = score.reshape(n, c, hr_pad, LANE)     # free reshape
    labels = labels.reshape(n, hr_pad, LANE)

    grid = (n, n_chunks, n_inner)
    kernel = functools.partial(_dice_kernel, n_classes=c, fuse_softmax=softmax)

    stat_shape = jax.ShapeDtypeStruct((n, n_chunks, c, LANE), jnp.float32)
    stat_spec = pl.BlockSpec((1, 1, c, LANE), lambda nn, p, j: (nn, p, 0, 0))

    inter, y_stat, z_stat = pl.pallas_call(
        kernel,
        out_shape=(stat_shape, stat_shape, stat_shape),
        grid_spec=pltpu.PrefetchScalarGridSpec(
            num_scalar_prefetch=0,
            grid=grid,
            in_specs=[
                # score: one block holds all C classes for tile_rows x 128 px
                pl.BlockSpec((1, c, tile_rows, LANE),
                             lambda nn, p, j: (nn, 0, p * n_inner + j, 0)),
                # labels: read exactly once per pixel
                pl.BlockSpec((1, tile_rows, LANE),
                             lambda nn, p, j: (nn, p * n_inner + j, 0)),
            ],
            out_specs=[stat_spec, stat_spec, stat_spec],
        ),
        compiler_params=pltpu.CompilerParams(
            dimension_semantics=("parallel", "parallel", "arbitrary"),
            vmem_limit_bytes=32 * 1024 * 1024),
    )(score, labels)

    # Tiny final reductions + dice formula (plain JAX glue).
    intersect = jnp.sum(inter, axis=(0, 1, 3))    # (C,)
    y_sum = jnp.sum(y_stat, axis=(0, 1, 3))
    z_sum = jnp.sum(z_stat, axis=(0, 1, 3))

    dice = 1.0 - (2.0 * intersect + SMOOTH) / (z_sum + y_sum + SMOOTH)

    if weight is None:
        weight = jnp.ones((n_classes,), jnp.float32)
    else:
        weight = jnp.asarray(weight, jnp.float32)

    # TODO(synk): the PyTorch module also builds a `class_wise_dice` Python list
    # via .item() that it never returns; that host-side bookkeeping is dropped.
    return jnp.sum(dice * weight) / n_classes


def _reference_dice_loss(inputs, target, n_classes, weight=None, softmax=False):
    """Pure-JAX reference mirroring the PyTorch module."""
    if softmax:
        inputs = jax.nn.softmax(inputs, axis=1)
    onehot = (target[:, None, :, :] == jnp.arange(n_classes)[None, :, None, None]
              ).astype(jnp.float32)
    if weight is None:
        weight = jnp.ones((n_classes,), jnp.float32)
    weight = jnp.asarray(weight, jnp.float32)
    loss = 0.0
    for i in range(n_classes):
        s = inputs[:, i].astype(jnp.float32)
        t = onehot[:, i]
        intersect = jnp.sum(s * t)
        y_sum = jnp.sum(t * t)
        z_sum = jnp.sum(s * s)
        dice = 1.0 - (2.0 * intersect + SMOOTH) / (z_sum + y_sum + SMOOTH)
        loss = loss + dice * weight[i]
    return loss / n_classes


if __name__ == "__main__":
    key = jax.random.PRNGKey(0)
    k1, k2 = jax.random.split(key)

    N, C, H, W = 2, 4, 16, 16
    logits = jax.random.normal(k1, (N, C, H, W), jnp.float32)
    target = jax.random.randint(k2, (N, H, W), 0, C, jnp.int32)

    # Typical usage: logits in, softmax fused inside the kernel.
    loss_sm = dice_loss(logits, target, n_classes=C, softmax=True)
    loss_sm = jax.block_until_ready(loss_sm)
    ref_sm = _reference_dice_loss(logits, target, C, softmax=True)
    assert jnp.allclose(loss_sm, ref_sm, rtol=1e-4, atol=1e-5), (loss_sm, ref_sm)

    # Also exercise the no-softmax path with per-class weights.
    probs = jax.nn.softmax(logits, axis=1)
    wts = jnp.array([1.0, 2.0, 0.5, 1.5], jnp.float32)
    loss_pl = dice_loss(probs, target, n_classes=C, weight=wts, softmax=False)
    loss_pl = jax.block_until_ready(loss_pl)
    ref_pl = _reference_dice_loss(probs, target, C, weight=wts, softmax=False)
    assert jnp.allclose(loss_pl, ref_pl, rtol=1e-4, atol=1e-5), (loss_pl, ref_pl)

    print("KERNEL_OK")
</pallas_src>

<mosaic_0001>
module attributes {stable_mosaic.version = 11 : i64} {
  func.func @_dice_kernel(%arg0: i32, %arg1: i32, %arg2: i32, %arg3: memref<1x4x8x128xf32, #tpu.memory_space<vmem>>, %arg4: memref<1x8x128xi32, #tpu.memory_space<vmem>>, %arg5: memref<1x1x4x128xf32, #tpu.memory_space<vmem>>, %arg6: memref<1x1x4x128xf32, #tpu.memory_space<vmem>>, %arg7: memref<1x1x4x128xf32, #tpu.memory_space<vmem>>) attributes {dimension_semantics = [#tpu.dimension_semantics<parallel>, #tpu.dimension_semantics<parallel>, #tpu.dimension_semantics<arbitrary>], iteration_bounds = array<i64: 2, 1, 1>, scalar_prefetch = 0 : i64, scratch_operands = 0 : i64, tpu.core_type = #tpu.core_type<tc>, window_params = [{transform_indices = @transform_0, window_bounds = array<i64: 1, 4, 8, 128>}, {transform_indices = @transform_1, window_bounds = array<i64: 1, 8, 128>}, {transform_indices = @transform_2, window_bounds = array<i64: 1, 1, 4, 128>}, {transform_indices = @transform_3, window_bounds = array<i64: 1, 1, 4, 128>}, {transform_indices = @transform_4, window_bounds = array<i64: 1, 1, 4, 128>}]} {
    %c0 = arith.constant 0 : index
    %c0_0 = arith.constant 0 : index
    %c0_1 = arith.constant 0 : index
    %0 = vector.load %arg4[%c0, %c0_0, %c0_1] : memref<1x8x128xi32, #tpu.memory_space<vmem>>, vector<1x8x128xi32>
    %1 = vector.shape_cast %0 : vector<1x8x128xi32> to vector<8x128xi32>
    %c0_2 = arith.constant 0 : index
    %c0_3 = arith.constant 0 : index
    %c0_4 = arith.constant 0 : index
    %c0_5 = arith.constant 0 : index
    %2 = vector.load %arg3[%c0_2, %c0_3, %c0_4, %c0_5] : memref<1x4x8x128xf32, #tpu.memory_space<vmem>>, vector<1x4x8x128xf32>
    %3 = vector.shape_cast %2 : vector<1x4x8x128xf32> to vector<4x8x128xf32>
    %cst = arith.constant dense<0xFF800000> : vector<8x128xf32>
    %4 = vector.multi_reduction <maximumf>, %3, %cst [0] : vector<4x8x128xf32> to vector<8x128xf32>
    %5 = vector.shape_cast %4 : vector<8x128xf32> to vector<1x8x128xf32>
    %6 = vector.broadcast %5 : vector<1x8x128xf32> to vector<4x8x128xf32>
    %7 = arith.subf %3, %6 : vector<4x8x128xf32>
    %8 = math.exp %7 : vector<4x8x128xf32>
    %cst_6 = arith.constant dense<0.000000e+00> : vector<8x128xf32>
    %9 = vector.multi_reduction <add>, %8, %cst_6 [0] : vector<4x8x128xf32> to vector<8x128xf32>
    %10 = vector.shape_cast %9 : vector<8x128xf32> to vector<1x8x128xf32>
    %11 = vector.broadcast %10 : vector<1x8x128xf32> to vector<4x8x128xf32>
    %12 = arith.divf %8, %11 : vector<4x8x128xf32>
    %c0_i32 = arith.constant 0 : i32
    %13 = vector.broadcast %c0_i32 : i32 to vector<8x128xi32>
    %14 = arith.cmpi sge, %1, %13 : vector<8x128xi32>
    %15 = arith.extui %14 : vector<8x128xi1> to vector<8x128xi32>
    %16 = arith.sitofp %15 : vector<8x128xi32> to vector<8x128xf32>
    %17 = vector.shape_cast %16 : vector<8x128xf32> to vector<1x8x128xf32>
    %18 = vector.broadcast %17 : vector<1x8x128xf32> to vector<4x8x128xf32>
    %19 = arith.mulf %12, %18 : vector<4x8x128xf32>
    %20 = vector.extract_strided_slice %19 {offsets = [0, 0, 0], sizes = [1, 8, 128], strides = [1, 1, 1]} : vector<4x8x128xf32> to vector<1x8x128xf32>
    %21 = vector.shape_cast %20 : vector<1x8x128xf32> to vector<8x128xf32>
    %c0_i32_7 = arith.constant 0 : i32
    %22 = vector.broadcast %c0_i32_7 : i32 to vector<8x128xi32>
    %23 = arith.cmpi eq, %1, %22 : vector<8x128xi32>
    %24 = arith.extui %23 : vector<8x128xi1> to vector<8x128xi32>
    %25 = arith.sitofp %24 : vector<8x128xi32> to vector<8x128xf32>
    %26 = arith.mulf %21, %25 : vector<8x128xf32>
    %cst_8 = arith.constant dense<0.000000e+00> : vector<128xf32>
    %27 = vector.multi_reduction <add>, %26, %cst_8 [0] : vector<8x128xf32> to vector<128xf32>
    %28 = vector.shape_cast %27 : vector<128xf32> to vector<1x128xf32>
    %cst_9 = arith.constant dense<0.000000e+00> : vector<128xf32>
    %29 = vector.multi_reduction <add>, %25, %cst_9 [0] : vector<8x128xf32> to vector<128xf32>
    %30 = vector.shape_cast %29 : vector<128xf32> to vector<1x128xf32>
    %31 = arith.mulf %21, %21 : vector<8x128xf32>
    %cst_10 = arith.constant dense<0.000000e+00> : vector<128xf32>
    %32 = vector.multi_reduction <add>, %31, %cst_10 [0] : vector<8x128xf32> to vector<128xf32>
    %33 = vector.shape_cast %32 : vector<128xf32> to vector<1x128xf32>
    %34 = vector.extract_strided_slice %19 {offsets = [1, 0, 0], sizes = [1, 8, 128], strides = [1, 1, 1]} : vector<4x8x128xf32> to vector<1x8x128xf32>
    %35 = vector.shape_cast %34 : vector<1x8x128xf32> to vector<8x128xf32>
    %c1_i32 = arith.constant 1 : i32
    %36 = vector.broadcast %c1_i32 : i32 to vector<8x128xi32>
    %37 = arith.cmpi eq, %1, %36 : vector<8x128xi32>
    %38 = arith.extui %37 : vector<8x128xi1> to vector<8x128xi32>
    %39 = arith.sitofp %38 : vector<8x128xi32> to vector<8x128xf32>
    %40 = arith.mulf %35, %39 : vector<8x128xf32>
    %cst_11 = arith.constant dense<0.000000e+00> : vector<128xf32>
    %41 = vector.multi_reduction <add>, %40, %cst_11 [0] : vector<8x128xf32> to vector<128xf32>
    %42 = vector.shape_cast %41 : vector<128xf32> to vector<1x128xf32>
    %cst_12 = arith.constant dense<0.000000e+00> : vector<128xf32>
    %43 = vector.multi_reduction <add>, %39, %cst_12 [0] : vector<8x128xf32> to vector<128xf32>
    %44 = vector.shape_cast %43 : vector<128xf32> to vector<1x128xf32>
    %45 = arith.mulf %35, %35 : vector<8x128xf32>
    %cst_13 = arith.constant dense<0.000000e+00> : vector<128xf32>
    %46 = vector.multi_reduction <add>, %45, %cst_13 [0] : vector<8x128xf32> to vector<128xf32>
    %47 = vector.shape_cast %46 : vector<128xf32> to vector<1x128xf32>
    %48 = vector.extract_strided_slice %19 {offsets = [2, 0, 0], sizes = [1, 8, 128], strides = [1, 1, 1]} : vector<4x8x128xf32> to vector<1x8x128xf32>
    %49 = vector.shape_cast %48 : vector<1x8x128xf32> to vector<8x128xf32>
    %c2_i32 = arith.constant 2 : i32
    %50 = vector.broadcast %c2_i32 : i32 to vector<8x128xi32>
    %51 = arith.cmpi eq, %1, %50 : vector<8x128xi32>
    %52 = arith.extui %51 : vector<8x128xi1> to vector<8x128xi32>
    %53 = arith.sitofp %52 : vector<8x128xi32> to vector<8x128xf32>
    %54 = arith.mulf %49, %53 : vector<8x128xf32>
    %cst_14 = arith.constant dense<0.000000e+00> : vector<128xf32>
    %55 = vector.multi_reduction <add>, %54, %cst_14 [0] : vector<8x128xf32> to vector<128xf32>
    %56 = vector.shape_cast %55 : vector<128xf32> to vector<1x128xf32>
    %cst_15 = arith.constant dense<0.000000e+00> : vector<128xf32>
    %57 = vector.multi_reduction <add>, %53, %cst_15 [0] : vector<8x128xf32> to vector<128xf32>
    %58 = vector.shape_cast %57 : vector<128xf32> to vector<1x128xf32>
    %59 = arith.mulf %49, %49 : vector<8x128xf32>
    %cst_16 = arith.constant dense<0.000000e+00> : vector<128xf32>
    %60 = vector.multi_reduction <add>, %59, %cst_16 [0] : vector<8x128xf32> to vector<128xf32>
    %61 = vector.shape_cast %60 : vector<128xf32> to vector<1x128xf32>
    %62 = vector.extract_strided_slice %19 {offsets = [3, 0, 0], sizes = [1, 8, 128], strides = [1, 1, 1]} : vector<4x8x128xf32> to vector<1x8x128xf32>
    %63 = vector.shape_cast %62 : vector<1x8x128xf32> to vector<8x128xf32>
    %c3_i32 = arith.constant 3 : i32
    %64 = vector.broadcast %c3_i32 : i32 to vector<8x128xi32>
    %65 = arith.cmpi eq, %1, %64 : vector<8x128xi32>
    %66 = arith.extui %65 : vector<8x128xi1> to vector<8x128xi32>
    %67 = arith.sitofp %66 : vector<8x128xi32> to vector<8x128xf32>
    %68 = arith.mulf %63, %67 : vector<8x128xf32>
    %cst_17 = arith.constant dense<0.000000e+00> : vector<128xf32>
    %69 = vector.multi_reduction <add>, %68, %cst_17 [0] : vector<8x128xf32> to vector<128xf32>
    %70 = vector.shape_cast %69 : vector<128xf32> to vector<1x128xf32>
    %cst_18 = arith.constant dense<0.000000e+00> : vector<128xf32>
    %71 = vector.multi_reduction <add>, %67, %cst_18 [0] : vector<8x128xf32> to vector<128xf32>
    %72 = vector.shape_cast %71 : vector<128xf32> to vector<1x128xf32>
    %73 = arith.mulf %63, %63 : vector<8x128xf32>
    %cst_19 = arith.constant dense<0.000000e+00> : vector<128xf32>
    %74 = vector.multi_reduction <add>, %73, %cst_19 [0] : vector<8x128xf32> to vector<128xf32>
    %75 = vector.shape_cast %74 : vector<128xf32> to vector<1x128xf32>
    %76 = tpu.concatenate %28, %42, %56, %70 in 0 : vector<1x128xf32>, vector<1x128xf32>, vector<1x128xf32>, vector<1x128xf32> -> vector<4x128xf32>
    %77 = vector.shape_cast %76 : vector<4x128xf32> to vector<1x1x4x128xf32>
    %78 = tpu.concatenate %30, %44, %58, %72 in 0 : vector<1x128xf32>, vector<1x128xf32>, vector<1x128xf32>, vector<1x128xf32> -> vector<4x128xf32>
    %79 = vector.shape_cast %78 : vector<4x128xf32> to vector<1x1x4x128xf32>
    %80 = tpu.concatenate %33, %47, %61, %75 in 0 : vector<1x128xf32>, vector<1x128xf32>, vector<1x128xf32>, vector<1x128xf32> -> vector<4x128xf32>
    %81 = vector.shape_cast %80 : vector<4x128xf32> to vector<1x1x4x128xf32>
    %c0_i32_20 = arith.constant 0 : i32
    %82 = arith.cmpi eq, %arg2, %c0_i32_20 : i32
    %83 = arith.extui %82 : i1 to i32
    %c0_i32_21 = arith.constant 0 : i32
    %84 = arith.cmpi ne, %83, %c0_i32_21 : i32
    scf.if %84 {
      %cst_46 = arith.constant 0.000000e+00 : f32
      %94 = vector.broadcast %cst_46 : f32 to vector<1x1x4x128xf32>
      %c0_47 = arith.constant 0 : index
      %c0_48 = arith.constant 0 : index
      %c0_49 = arith.constant 0 : index
      %c0_50 = arith.constant 0 : index
      %95 = vector.load %arg5[%c0_47, %c0_48, %c0_49, %c0_50] : memref<1x1x4x128xf32, #tpu.memory_space<vmem>>, vector<1x1x4x128xf32>
      tpu.vector_store %arg5[%c0_47, %c0_48, %c0_49, %c0_50], %94 {strides = array<i32>} : memref<1x1x4x128xf32, #tpu.memory_space<vmem>>, vector<1x1x4x128xf32>,
      %cst_51 = arith.constant 0.000000e+00 : f32
      %96 = vector.broadcast %cst_51 : f32 to vector<1x1x4x128xf32>
      %c0_52 = arith.constant 0 : index
      %c0_53 = arith.constant 0 : index
      %c0_54 = arith.constant 0 : index
      %c0_55 = arith.constant 0 : index
      %97 = vector.load %arg6[%c0_52, %c0_53, %c0_54, %c0_55] : memref<1x1x4x128xf32, #tpu.memory_space<vmem>>, vector<1x1x4x128xf32>
      tpu.vector_store %arg6[%c0_52, %c0_53, %c0_54, %c0_55], %96 {strides = array<i32>} : memref<1x1x4x128xf32, #tpu.memory_space<vmem>>, vector<1x1x4x128xf32>,
      %cst_56 = arith.constant 0.000000e+00 : f32
      %98 = vector.broadcast %cst_56 : f32 to vector<1x1x4x128xf32>
      %c0_57 = arith.constant 0 : index
      %c0_58 = arith.constant 0 : index
      %c0_59 = arith.constant 0 : index
      %c0_60 = arith.constant 0 : index
      %99 = vector.load %arg7[%c0_57, %c0_58, %c0_59, %c0_60] : memref<1x1x4x128xf32, #tpu.memory_space<vmem>>, vector<1x1x4x128xf32>
      tpu.vector_store %arg7[%c0_57, %c0_58, %c0_59, %c0_60], %98 {strides = array<i32>} : memref<1x1x4x128xf32, #tpu.memory_space<vmem>>, vector<1x1x4x128xf32>,
    } else {
    }
    %c0_22 = arith.constant 0 : index
    %c0_23 = arith.constant 0 : index
    %c0_24 = arith.constant 0 : index
    %c0_25 = arith.constant 0 : index
    %85 = vector.load %arg5[%c0_22, %c0_23, %c0_24, %c0_25] : memref<1x1x4x128xf32, #tpu.memory_space<vmem>>, vector<1x1x4x128xf32>
    %86 = arith.addf %85, %77 : vector<1x1x4x128xf32>
    %c0_26 = arith.constant 0 : index
    %c0_27 = arith.constant 0 : index
    %c0_28 = arith.constant 0 : index
    %c0_29 = arith.constant 0 : index
    %87 = vector.load %arg5[%c0_26, %c0_27, %c0_28, %c0_29] : memref<1x1x4x128xf32, #tpu.memory_space<vmem>>, vector<1x1x4x128xf32>
    tpu.vector_store %arg5[%c0_26, %c0_27, %c0_28, %c0_29], %86 {strides = array<i32>} : memref<1x1x4x128xf32, #tpu.memory_space<vmem>>, vector<1x1x4x128xf32>,
    %c0_30 = arith.constant 0 : index
    %c0_31 = arith.constant 0 : index
    %c0_32 = arith.constant 0 : index
    %c0_33 = arith.constant 0 : index
    %88 = vector.load %arg6[%c0_30, %c0_31, %c0_32, %c0_33] : memref<1x1x4x128xf32, #tpu.memory_space<vmem>>, vector<1x1x4x128xf32>
    %89 = arith.addf %88, %79 : vector<1x1x4x128xf32>
    %c0_34 = arith.constant 0 : index
    %c0_35 = arith.constant 0 : index
    %c0_36 = arith.constant 0 : index
    %c0_37 = arith.constant 0 : index
    %90 = vector.load %arg6[%c0_34, %c0_35, %c0_36, %c0_37] : memref<1x1x4x128xf32, #tpu.memory_space<vmem>>, vector<1x1x4x128xf32>
    tpu.vector_store %arg6[%c0_34, %c0_35, %c0_36, %c0_37], %89 {strides = array<i32>} : memref<1x1x4x128xf32, #tpu.memory_space<vmem>>, vector<1x1x4x128xf32>,
    %c0_38 = arith.constant 0 : index
    %c0_39 = arith.constant 0 : index
    %c0_40 = arith.constant 0 : index
    %c0_41 = arith.constant 0 : index
    %91 = vector.load %arg7[%c0_38, %c0_39, %c0_40, %c0_41] : memref<1x1x4x128xf32, #tpu.memory_space<vmem>>, vector<1x1x4x128xf32>
    %92 = arith.addf %91, %81 : vector<1x1x4x128xf32>
    %c0_42 = arith.constant 0 : index
    %c0_43 = arith.constant 0 : index
    %c0_44 = arith.constant 0 : index
    %c0_45 = arith.constant 0 : index
    %93 = vector.load %arg7[%c0_42, %c0_43, %c0_44, %c0_45] : memref<1x1x4x128xf32, #tpu.memory_space<vmem>>, vector<1x1x4x128xf32>
    tpu.vector_store %arg7[%c0_42, %c0_43, %c0_44, %c0_45], %92 {strides = array<i32>} : memref<1x1x4x128xf32, #tpu.memory_space<vmem>>, vector<1x1x4x128xf32>,
    return
  }
  func.func @transform_0(%arg0: i32, %arg1: i32, %arg2: i32) -> (i32, i32, i32, i32) {
    %c1_i32 = arith.constant 1 : i32
    %0 = arith.muli %arg1, %c1_i32 : i32
    %1 = arith.addi %0, %arg2 : i32
    %c0_i32 = arith.constant 0 : i32
    %c0_i32_0 = arith.constant 0 : i32
    %c0_i32_1 = arith.constant 0 : i32
    return %arg0, %c0_i32, %1, %c0_i32_0 : i32, i32, i32, i32
  }
  func.func @transform_1(%arg0: i32, %arg1: i32, %arg2: i32) -> (i32, i32, i32) {
    %c1_i32 = arith.constant 1 : i32
    %0 = arith.muli %arg1, %c1_i32 : i32
    %1 = arith.addi %0, %arg2 : i32
    %c0_i32 = arith.constant 0 : i32
    %c0_i32_0 = arith.constant 0 : i32
    return %arg0, %1, %c0_i32 : i32, i32, i32
  }
  func.func @transform_2(%arg0: i32, %arg1: i32, %arg2: i32) -> (i32, i32, i32, i32) {
    %c0_i32 = arith.constant 0 : i32
    %c0_i32_0 = arith.constant 0 : i32
    %c0_i32_1 = arith.constant 0 : i32
    return %arg0, %arg1, %c0_i32, %c0_i32_0 : i32, i32, i32, i32
  }
  func.func @transform_3(%arg0: i32, %arg1: i32, %arg2: i32) -> (i32, i32, i32, i32) {
    %c0_i32 = arith.constant 0 : i32
    %c0_i32_0 = arith.constant 0 : i32
    %c0_i32_1 = arith.constant 0 : i32
    return %arg0, %arg1, %c0_i32, %c0_i32_0 : i32, i32, i32, i32
  }
  func.func @transform_4(%arg0: i32, %arg1: i32, %arg2: i32) -> (i32, i32, i32, i32) {
    %c0_i32 = arith.constant 0 : i32
    %c0_i32_0 = arith.constant 0 : i32
    %c0_i32_1 = arith.constant 0 : i32
    return %arg0, %arg1, %c0_i32, %c0_i32_0 : i32, i32, i32, i32
  }
}

</mosaic_0001>

<llo_original>
// kernel: dice_loss.1
$region0: #{dice_loss.1}
  #allocation0 [shape = 'u32[]', space=smem, size = 0x4, offset = 0x4, fixed_abs, tag = 'smem constant byte address 0x4 - core index']
  #allocation1 [shape = 'u32[144,128]{1,0:T(1,128)}', space=vmem, size = 0x12000, scoped, tag = 'internal scratch']
  %s0 = inlined_call_operand.vmem [shape: f32[2,4,8,128], index: 0, kind: input, shape index: {}]
  %s1 = inlined_call_operand.vmem [shape: s32[2,8,128], index: 1, kind: input, shape index: {}]
  %s2 = inlined_call_operand.vmem [shape: f32[2,1,4,128], index: 2, kind: output, shape index: {0}]
  %s3 = inlined_call_operand.vmem [shape: f32[2,1,4,128], index: 3, kind: output, shape index: {1}]
  %s4 = inlined_call_operand.vmem [shape: f32[2,1,4,128], index: 4, kind: output, shape index: {2}]
  %5 = xla_tuple %s2, %s3, %s4
  %s6 = sld [smem:[#allocation0]]
  $region61: #{dice_loss.1} parent=0
    _
  %s8 = ssub.s32 1, %s6
  %s9 = scalar_select 0, %s8, %s6
  loop: start=0, step=1, limit=4
  $region2: #{dice_loss.1} parent=0 // loop_pre_header
    _
  $region3: #{dice_loss.1} parent=0 // loop_header
    %s11 = sphi 0, %s15
    %p12 = scmp.ge.s32.totalorder %s11, 4
    %s18 = sphi 0, %s37
    %s19 = sphi 0, %s33
    %s20 = sphi 0, %s29
    %s21 = sphi 0, %s18
    %s22 = sphi 0, %s19
    %s23 = sphi 0, %s20
    %s24 = sphi 0, %s21
    %s25 = sphi 0, %s22
    %s26 = sphi 0, %s23
    %s44 = sphi 0, %s46
    %s47 = sphi 0, %s44
    %s48 = sphi 0, %s47
    %s64 = sphi 0, %s48
    %s74 = sphi 0, %s76
    %s77 = sphi 0, %s74
    %s78 = sphi 0, %s77
    %s94 = sphi 0, %s78
    %s102 = sphi 0, %s104
    %s105 = sphi 0, %s102
    %s106 = sphi 0, %s105
    %s122 = sphi 0, %s106
    %s130 = sphi 0, %s132
    %s133 = sphi 0, %s130
    %s134 = sphi 0, %s133
    %s150 = sphi 0, %s134
    %s158 = sphi 0, %s160
    %s161 = sphi 0, %s158
    %s162 = sphi 0, %s161
    %s178 = sphi 0, %s162
  $region4: #{dice_loss.1} parent=0 // loop_header_branch
    %14 = sbr.rel (%p12) target = $region8
  $region5: #{dice_loss.1} parent=0 // loop_body
    %s16 = ssub.s32 %s11, 1
    %s17 = ssub.s32 %s11, 2
    %s27 = sadd.s32 1, %s20
    %p28 = scmp.ge.s32.totalorder %s27, 1
    %s29 = scalar_select %p28, 0, %s27
    %s30 = sadd.s32 1, %s19
    %s31 = scalar_select %p28, %s30, %s19
    %p32 = scmp.ge.s32.totalorder %s31, 1
    %s33 = scalar_select %p32, 0, %s31
    %s34 = sadd.s32 1, %s18
    %s35 = scalar_select %p32, %s34, %s18
    %p36 = scmp.ge.s32.totalorder %s35, 2
    %s37 = scalar_select %p36, 0, %s35
    %s38 = sadd.s32 %s19, %s20
    %s39 = sadd.s32 %s33, %s29
    %s40 = ssub.s32 %s18, %s37
    %s41 = ssub.s32 %s38, %s39
    %s42 = sor.u32 %s40, %s41
    %p43 = scmp.eq.s32.totalorder %s42, 0
    %s45 = sadd.s32 %s44, 1
    %s46 = scalar_select %p43, %s44, %s45
    %p49 = pneg %p43
    %p50 = scmp.eq.s32.totalorder %s11, 1
    %p51 = por %p49, %p50
    %p52 = scmp.ne.s32.totalorder %s44, %s47
    %p53 = scmp.eq.s32.totalorder %s11, 0
    %p54 = por %p52, %p53
    %p55 = scmp.ne.s32.totalorder %s44, %s47
    %p56 = scmp.eq.s32.totalorder %s16, 1
    %p57 = por %p55, %p56
    %p58 = scmp.ne.s32.totalorder %s47, %s48
    %p59 = scmp.eq.s32.totalorder %s16, 0
    %p60 = por %p58, %p59
    %p61 = scmp.ne.s32.totalorder %s47, %s48
    %p62 = scmp.eq.s32.totalorder %s17, 1
    %p63 = por %p61, %p62
    %p65 = scmp.ne.s32.totalorder %s48, %s64
    %p66 = scmp.eq.s32.totalorder %s17, 0
    %p67 = por %p65, %p66
    %s68 = sadd.s32 %s19, %s20
    %s69 = sadd.s32 %s33, %s29
    %s70 = ssub.s32 %s18, %s37
    %s71 = ssub.s32 %s68, %s69
    %s72 = sor.u32 %s70, %s71
    %p73 = scmp.eq.s32.totalorder %s72, 0
    %s75 = sadd.s32 %s74, 1
    %s76 = scalar_select %p73, %s74, %s75
    %p79 = pneg %p73
    %p80 = scmp.eq.s32.totalorder %s11, 1
    %p81 = por %p79, %p80
    %p82 = scmp.ne.s32.totalorder %s74, %s77
    %p83 = scmp.eq.s32.totalorder %s11, 0
    %p84 = por %p82, %p83
    %p85 = scmp.ne.s32.totalorder %s74, %s77
    %p86 = scmp.eq.s32.totalorder %s16, 1
    %p87 = por %p85, %p86
    %p88 = scmp.ne.s32.totalorder %s77, %s78
    %p89 = scmp.eq.s32.totalorder %s16, 0
    %p90 = por %p88, %p89
    %p91 = scmp.ne.s32.totalorder %s77, %s78
    %p92 = scmp.eq.s32.totalorder %s17, 1
    %p93 = por %p91, %p92
    %p95 = scmp.ne.s32.totalorder %s78, %s94
    %p96 = scmp.eq.s32.totalorder %s17, 0
    %p97 = por %p95, %p96
    %s98 = ssub.s32 %s18, %s37
    %s99 = ssub.s32 %s19, %s33
    %s100 = sor.u32 %s98, %s99
    %p101 = scmp.eq.s32.totalorder %s100, 0
    %s103 = sadd.s32 %s102, 1
    %s104 = scalar_select %p101, %s102, %s103
    %p107 = pneg %p101
    %p108 = scmp.eq.s32.totalorder %s11, 1
    %p109 = por %p107, %p108
    %p110 = scmp.ne.s32.totalorder %s102, %s105
    %p111 = scmp.eq.s32.totalorder %s11, 0
    %p112 = por %p110, %p111
    %p113 = scmp.ne.s32.totalorder %s102, %s105
    %p114 = scmp.eq.s32.totalorder %s16, 1
    %p115 = por %p113, %p114
    %p116 = scmp.ne.s32.totalorder %s105, %s106
    %p117 = scmp.eq.s32.totalorder %s16, 0
    %p118 = por %p116, %p117
    %p119 = scmp.ne.s32.totalorder %s105, %s106
    %p120 = scmp.eq.s32.totalorder %s17, 1
    %p121 = por %p119, %p120
    %p123 = scmp.ne.s32.totalorder %s106, %s122
    %p124 = scmp.eq.s32.totalorder %s17, 0
    %p125 = por %p123, %p124
    %s126 = ssub.s32 %s18, %s37
    %s127 = ssub.s32 %s19, %s33
    %s128 = sor.u32 %s126, %s127
    %p129 = scmp.eq.s32.totalorder %s128, 0
    %s131 = sadd.s32 %s130, 1
    %s132 = scalar_select %p129, %s130, %s131
    %p135 = pneg %p129
    %p136 = scmp.eq.s32.totalorder %s11, 1
    %p137 = por %p135, %p136
    %p138 = scmp.ne.s32.totalorder %s130, %s133
    %p139 = scmp.eq.s32.totalorder %s11, 0
    %p140 = por %p138, %p139
    %p141 = scmp.ne.s32.totalorder %s130, %s133
    %p142 = scmp.eq.s32.totalorder %s16, 1
    %p143 = por %p141, %p142
    %p144 = scmp.ne.s32.totalorder %s133, %s134
    %p145 = scmp.eq.s32.totalorder %s16, 0
    %p146 = por %p144, %p145
    %p147 = scmp.ne.s32.totalorder %s133, %s134
    %p148 = scmp.eq.s32.totalorder %s17, 1
    %p149 = por %p147, %p148
    %p151 = scmp.ne.s32.totalorder %s134, %s150
    %p152 = scmp.eq.s32.totalorder %s17, 0
    %p153 = por %p151, %p152
    %s154 = ssub.s32 %s18, %s37
    %s155 = ssub.s32 %s19, %s33
    %s156 = sor.u32 %s154, %s155
    %p157 = scmp.eq.s32.totalorder %s156, 0
    %s159 = sadd.s32 %s158, 1
    %s160 = scalar_select %p157, %s158, %s159
    %p163 = pneg %p157
    %p164 = scmp.eq.s32.totalorder %s11, 1
    %p165 = por %p163, %p164
    %p166 = scmp.ne.s32.totalorder %s158, %s161
    %p167 = scmp.eq.s32.totalorder %s11, 0
    %p168 = por %p166, %p167
    %p169 = scmp.ne.s32.totalorder %s158, %s161
    %p170 = scmp.eq.s32.totalorder %s16, 1
    %p171 = por %p169, %p170
    %p172 = scmp.ne.s32.totalorder %s161, %s162
    %p173 = scmp.eq.s32.totalorder %s16, 0
    %p174 = por %p172, %p173
    %p175 = scmp.ne.s32.totalorder %s161, %s162
    %p176 = scmp.eq.s32.totalorder %s17, 1
    %p177 = por %p175, %p176
    %p179 = scmp.ne.s32.totalorder %s162, %s178
    %p180 = scmp.eq.s32.totalorder %s17, 0
    %p181 = por %p179, %p180
    %p182 = scmp.le.s32.totalorder 1, %s11
    %p183 = scmp.lt.s32.totalorder %s11, 3
    %p184 = pnand %p182, %p183
    %p185 = pneg %p184
    // Predicated region
    $region9: #{dice_loss.1} parent=5 // pred_check
      _
    $region10: #{dice_loss.1} parent=5 // pred_check_branch
      %187 = sbr.rel (%p184) target = $region12
    $region11: #{dice_loss.1} parent=5 // pred_region
      %s188 = ssub.s32 %s11, 1
    $region12: #{dice_loss.1} parent=5 // pred_fallthru
      _
    %p189 = scmp.lt.s32.totalorder %s11, 2
    // Predicated region
    $region13: #{dice_loss.1} parent=5 // pred_check
      %p190 = pneg %p189
    $region14: #{dice_loss.1} parent=5 // pred_check_branch
      %192 = sbr.rel (%p190) target = $region16
    $region15: #{dice_loss.1} parent=5 // pred_region
      // Predicated region
      $region17: #{dice_loss.1} parent=15 // pred_check
        %p193 = pneg %p54
      $region18: #{dice_loss.1} parent=15 // pred_check_branch
        %195 = sbr.rel (%p193) target = $region20
      $region19: #{dice_loss.1} parent=15 // pred_region
        %s196 = sadd.s32 %s19, %s20
        %p197 = scmp.lt.s32.totalorder %s18, 1
        %s198 = scalar_select %p197, %s18, 1
        %p199 = scmp.lt.s32.totalorder %s196, 0
        %s200 = scalar_select %p199, %s196, 0
        %s201 = smul.addr %s198, 4
        %s202 = sadd.s32 %s200, %s201
        %s203 = smul.addr %s202, 8
        %s204 = scalar_lea.vmem %s0, %s203
        %s205 = sadd.s32 %s19, %s20
      $region20: #{dice_loss.1} parent=15 // pred_fallthru
        _
      // Predicated region
      $region21: #{dice_loss.1} parent=15 // pred_check
        %p206 = pneg %p84
      $region22: #{dice_loss.1} parent=15 // pred_check_branch
        %208 = sbr.rel (%p206) target = $region24
      $region23: #{dice_loss.1} parent=15 // pred_region
        %s209 = sadd.s32 %s19, %s20
        %p210 = scmp.lt.s32.totalorder %s18, 1
        %s211 = scalar_select %p210, %s18, 1
        %p212 = scmp.lt.s32.totalorder %s209, 0
        %s213 = scalar_select %p212, %s209, 0
        %s214 = sadd.s32 %s213, %s211
        %s215 = smul.addr %s214, 8
        %s216 = scalar_lea.vmem %s1, %s215
        %s217 = sadd.s32 %s19, %s20
      $region24: #{dice_loss.1} parent=15 // pred_fallthru
        _
    $region16: #{dice_loss.1} parent=5 // pred_fallthru
      _
    %p218 = scmp.le.s32.totalorder 1, %s11
    %p219 = scmp.lt.s32.totalorder %s11, 3
    %p220 = pnand %p218, %p219
    %p221 = pneg %p220
    // Predicated region
    $region25: #{dice_loss.1} parent=5 // pred_check
      _
    $region26: #{dice_loss.1} parent=5 // pred_check_branch
      %223 = sbr.rel (%p220) target = $region28
    $region27: #{dice_loss.1} parent=5 // pred_region
      %s224 = ssub.s32 %s11, 1
      %s225 = sadd.s32 %s22, %s23
      %p226 = scmp.lt.s32.totalorder %s21, 1
      %s227 = scalar_select %p226, %s21, 1
      %p228 = scmp.lt.s32.totalorder %s225, 0
      %s229 = scalar_select %p228, %s225, 0
      %s230 = smul.addr %s227, 4
      %s231 = sadd.s32 %s229, %s230
      %s232 = smul.addr %s231, 8
      %s233 = scalar_lea.vmem %s0, %s232
      %p234 = pneg %p60
      %p235 = pneg %p57
      %s236 = sadd.s32 %s22, %s23
      %p237 = scmp.lt.s32.totalorder %s21, 1
      %s238 = scalar_select %p237, %s21, 1
      %p239 = scmp.lt.s32.totalorder %s236, 0
      %s240 = scalar_select %p239, %s236, 0
      %s241 = sadd.s32 %s240, %s238
      %s242 = smul.addr %s241, 8
      %s243 = scalar_lea.vmem %s1, %s242
      %p244 = pneg %p90
      %p245 = pneg %p87
      %p246 = pneg %p118
      %p247 = pneg %p115
      %p248 = scmp.lt.s32.totalorder %s21, 1
      %s249 = scalar_select %p248, %s21, 1
      %p250 = scmp.lt.s32.totalorder %s22, 0
      %s251 = scalar_select %p250, %s22, 0
      %s252 = sadd.s32 %s251, %s249
      %s253 = smul.addr %s252, 4
      %s254 = scalar_lea.vmem %s2, %s253
      %p255 = pneg %p146
      %p256 = pneg %p143
      %p257 = scmp.lt.s32.totalorder %s21, 1
      %s258 = scalar_select %p257, %s21, 1
      %p259 = scmp.lt.s32.totalorder %s22, 0
      %s260 = scalar_select %p259, %s22, 0
      %s261 = sadd.s32 %s260, %s258
      %s262 = smul.addr %s261, 4
      %s263 = scalar_lea.vmem %s3, %s262
      %p264 = pneg %p174
      %p265 = pneg %p171
      %p266 = scmp.lt.s32.totalorder %s21, 1
      %s267 = scalar_select %p266, %s21, 1
      %p268 = scmp.lt.s32.totalorder %s22, 0
      %s269 = scalar_select %p268, %s22, 0
      %s270 = sadd.s32 %s269, %s267
      %s271 = smul.addr %s270, 4
      %s272 = scalar_lea.vmem %s4, %s271
      %s273 = sadd.s32 %s22, %s23
      %p274 = scmp.lt.s32.totalorder %s21, 1
      %s275 = scalar_select %p274, %s21, 1
      %p276 = scmp.lt.s32.totalorder %s273, 0
      %s277 = scalar_select %p276, %s273, 0
      %s278 = smul.addr %s275, 4
      %s279 = sadd.s32 %s277, %s278
      %s280 = smul.addr %s279, 8
      %s281 = scalar_lea.vmem %s0, %s280
      %s282 = sadd.s32 %s22, %s23
      %s283 = sadd.s32 %s22, %s23
      %p284 = scmp.lt.s32.totalorder %s21, 1
      %s285 = scalar_select %p284, %s21, 1
      %p286 = scmp.lt.s32.totalorder %s283, 0
      %s287 = scalar_select %p286, %s283, 0
      %s288 = sadd.s32 %s287, %s285
      %s289 = smul.addr %s288, 8
      %s290 = scalar_lea.vmem %s1, %s289
      %s291 = sadd.s32 %s22, %s23
      %p292 = scmp.lt.s32.totalorder %s21, 1
      %s293 = scalar_select %p292, %s21, 1
      %p294 = scmp.lt.s32.totalorder %s22, 0
      %s295 = scalar_select %p294, %s22, 0
      %s296 = sadd.s32 %s295, %s293
      %s297 = smul.addr %s296, 4
      %s298 = scalar_lea.vmem %s2, %s297
      %p299 = scmp.lt.s32.totalorder %s21, 1
      %s300 = scalar_select %p299, %s21, 1
      %p301 = scmp.lt.s32.totalorder %s22, 0
      %s302 = scalar_select %p301, %s22, 0
      %s303 = sadd.s32 %s302, %s300
      %s304 = smul.addr %s303, 4
      %s305 = scalar_lea.vmem %s3, %s304
      %p306 = scmp.lt.s32.totalorder %s21, 1
      %s307 = scalar_select %p306, %s21, 1
      %p308 = scmp.lt.s32.totalorder %s22, 0
      %s309 = scalar_select %p308, %s22, 0
      %s310 = sadd.s32 %s309, %s307
      %s311 = smul.addr %s310, 4
      %s312 = scalar_lea.vmem %s4, %s311
      %v313 = vld [vmem:[%s290] sm:$0xff]
      %v314 = vld [vmem:[%s281] sm:$0xff]
      %v315 = vld [vmem:[%s281 + $0x8] sm:$0xff]
      %v316 = vld [vmem:[%s281 + $0x10] sm:$0xff]
      %v317 = vld [vmem:[%s281 + $0x18] sm:$0xff]
      %v318 = vmax.f32 %v314, %v315
      %v319 = vmax.f32 %v316, %v317
      %v320 = vmax.f32 %v318, %v319
      %v321 = vsub.f32 %v314, %v320
      %v322 = vsub.f32 %v315, %v320
      %v323 = vsub.f32 %v316, %v320
      %v324 = vsub.f32 %v317, %v320
      %v325 = vmul.f32 %v321, 1.442695
      %v326 = vpow.pop %v325
      %v327 = vmul.f32 %v322, 1.442695
      %v328 = vpow.pop %v327
      %v329 = vmul.f32 %v323, 1.442695
      %v330 = vpow.pop %v329
      %v331 = vmul.f32 %v324, 1.442695
      %v332 = vpow.pop %v331
      %v333 = vadd.f32 %v326, %v328
      %v334 = vadd.f32 %v333, %v330
      %v335 = vadd.f32 %v334, %v332
      %v336 = vrcp.pop %v335
      %v337 = vmul.f32 %v326, %v336
      %v338 = vmul.f32 %v328, %v336
      %v339 = vmul.f32 %v330, %v336
      %v340 = vmul.f32 %v332, %v336
      %vm341 = vcmp.ge.s32.totalorder %v313, 0
      %v342 = vsel %vm341, 1, 0
      %v343 = vcvt.s32.f32 %v342
      %v344 = vmul.f32 %v337, %v343
      %v345 = vmul.f32 %v338, %v343
      %v346 = vmul.f32 %v339, %v343
      %v347 = vmul.f32 %v340, %v343
      %vm348 = vcmp.eq.s32.totalorder %v313, 0
      %v349 = vsel %vm348, 1, 0
      %v350 = vcvt.s32.f32 %v349
      %v351 = vmul.f32 %v344, %v350
      %v352 = vrot.slane %v351, 4
      %v353 = vadd.f32 %v351, %v352
      %v354 = vrot.slane %v353, 2
      %v355 = vadd.f32 %v353, %v354
      %v356 = vrot.slane %v355, 1
      %v357 = vadd.f32 %v355, %v356
      %v358 = vrot.slane %v350, 4
      %v359 = vadd.f32 %v350, %v358
      %v360 = vrot.slane %v359, 2
      %v361 = vadd.f32 %v359, %v360
      %v362 = vrot.slane %v361, 1
      %v363 = vadd.f32 %v361, %v362
      %v364 = vmul.f32 %v344, %v344
      %v365 = vrot.slane %v364, 4
      %v366 = vadd.f32 %v364, %v365
      %v367 = vrot.slane %v366, 2
      %v368 = vadd.f32 %v366, %v367
      %v369 = vrot.slane %v368, 1
      %v370 = vadd.f32 %v368, %v369
      %vm371 = vcmp.eq.s32.totalorder %v313, 1
      %v372 = vsel %vm371, 1, 0
      %v373 = vcvt.s32.f32 %v372
      %v374 = vmul.f32 %v345, %v373
      %v375 = vrot.slane %v374, 4
      %v376 = vadd.f32 %v374, %v375
      %v377 = vrot.slane %v376, 2
      %v378 = vadd.f32 %v376, %v377
      %v379 = vrot.slane %v378, 1
      %v380 = vadd.f32 %v378, %v379
      %v381 = vrot.slane %v373, 4
      %v382 = vadd.f32 %v373, %v381
      %v383 = vrot.slane %v382, 2
      %v384 = vadd.f32 %v382, %v383
      %v385 = vrot.slane %v384, 1
      %v386 = vadd.f32 %v384, %v385
      %v387 = vmul.f32 %v345, %v345
      %v388 = vrot.slane %v387, 4
      %v389 = vadd.f32 %v387, %v388
      %v390 = vrot.slane %v389, 2
      %v391 = vadd.f32 %v389, %v390
      %v392 = vrot.slane %v391, 1
      %v393 = vadd.f32 %v391, %v392
      %vm394 = vcmp.eq.s32.totalorder %v313, 2
      %v395 = vsel %vm394, 1, 0
      %v396 = vcvt.s32.f32 %v395
      %v397 = vmul.f32 %v346, %v396
      %v398 = vrot.slane %v397, 4
      %v399 = vadd.f32 %v397, %v398
      %v400 = vrot.slane %v399, 2
      %v401 = vadd.f32 %v399, %v400
      %v402 = vrot.slane %v401, 1
      %v403 = vadd.f32 %v401, %v402
      %v404 = vrot.slane %v396, 4
      %v405 = vadd.f32 %v396, %v404
      %v406 = vrot.slane %v405, 2
      %v407 = vadd.f32 %v405, %v406
      %v408 = vrot.slane %v407, 1
      %v409 = vadd.f32 %v407, %v408
      %v410 = vmul.f32 %v346, %v346
      %v411 = vrot.slane %v410, 4
      %v412 = vadd.f32 %v410, %v411
      %v413 = vrot.slane %v412, 2
      %v414 = vadd.f32 %v412, %v413
      %v415 = vrot.slane %v414, 1
      %v416 = vadd.f32 %v414, %v415
      %vm417 = vcmp.eq.s32.totalorder %v313, 3
      %v418 = vsel %vm417, 1, 0
      %v419 = vcvt.s32.f32 %v418
      %v420 = vmul.f32 %v347, %v419
      %v421 = vrot.slane %v420, 4
      %v422 = vadd.f32 %v420, %v421
      %v423 = vrot.slane %v422, 2
      %v424 = vadd.f32 %v422, %v423
      %v425 = vrot.slane %v424, 1
      %v426 = vadd.f32 %v424, %v425
      %v427 = vrot.slane %v419, 4
      %v428 = vadd.f32 %v419, %v427
      %v429 = vrot.slane %v428, 2
      %v430 = vadd.f32 %v428, %v429
      %v431 = vrot.slane %v430, 1
      %v432 = vadd.f32 %v430, %v431
      %v433 = vmul.f32 %v347, %v347
      %v434 = vrot.slane %v433, 4
      %v435 = vadd.f32 %v433, %v434
      %v436 = vrot.slane %v435, 2
      %v437 = vadd.f32 %v435, %v436
      %v438 = vrot.slane %v437, 1
      %v439 = vadd.f32 %v437, %v438
      %vm440 = vcmask 1040384
      %v441 = vsel %vm440, %v357, %v380
      %vm442 = vcmask 1041408
      %v443 = vsel %vm442, %v441, %v403
      %vm444 = vcmask 1042432
      %v445 = vsel %vm444, %v443, %v426
      %v446 = vsel %vm440, %v363, %v386
      %v447 = vsel %vm442, %v446, %v409
      %v448 = vsel %vm444, %v447, %v432
      %v449 = vsel %vm440, %v370, %v393
      %v450 = vsel %vm442, %v449, %v416
      %v451 = vsel %vm444, %v450, %v439
      %p452 = scmp.eq.s32.totalorder %s23, 0
      // Predicated region
      $region29: #{dice_loss.1} parent=27 // pred_check
        %p453 = pneg %p452
      $region30: #{dice_loss.1} parent=27 // pred_check_branch
        %455 = sbr.rel (%p453) target = $region32
      $region31: #{dice_loss.1} parent=27 // pred_region
        %456 = vst [vmem:[%s298] sm:$0xf] 0.0
        %457 = vst [vmem:[%s305] sm:$0xf] 0.0
        %458 = vst [vmem:[%s312] sm:$0xf] 0.0
      $region32: #{dice_loss.1} parent=27 // pred_fallthru
        _
      %v459 = vld [vmem:[%s298] sm:$0xf]
      %v460 = vadd.f32 %v459, %v445
      %461 = vst [vmem:[%s298] sm:$0xf] %v460
      %v462 = vld [vmem:[%s305] sm:$0xf]
      %v463 = vadd.f32 %v462, %v448
      %464 = vst [vmem:[%s305] sm:$0xf] %v463
      %v465 = vld [vmem:[%s312] sm:$0xf]
      %v466 = vadd.f32 %v465, %v451
      %467 = vst [vmem:[%s312] sm:$0xf] %v466
      %p468 = scmp.lt.s32.totalorder %s21, 1
      %s469 = scalar_select %p468, %s21, 1
      %p470 = scmp.lt.s32.totalorder %s22, 0
      %s471 = scalar_select %p470, %s22, 0
      %s472 = sadd.s32 %s471, %s469
      %s473 = smul.addr %s472, 4
      %s474 = scalar_lea.vmem %s2, %s473
      %p475 = scmp.lt.s32.totalorder %s21, 1
      %s476 = scalar_select %p475, %s21, 1
      %p477 = scmp.lt.s32.totalorder %s22, 0
      %s478 = scalar_select %p477, %s22, 0
      %s479 = sadd.s32 %s478, %s476
      %s480 = smul.addr %s479, 4
      %s481 = scalar_lea.vmem %s3, %s480
      %p482 = scmp.lt.s32.totalorder %s21, 1
      %s483 = scalar_select %p482, %s21, 1
      %p484 = scmp.lt.s32.totalorder %s22, 0
      %s485 = scalar_select %p484, %s22, 0
      %s486 = sadd.s32 %s485, %s483
      %s487 = smul.addr %s486, 4
      %s488 = scalar_lea.vmem %s4, %s487
      // Predicated region
      $region33: #{dice_loss.1} parent=27 // pred_check
        %p489 = pneg %p115
      $region34: #{dice_loss.1} parent=27 // pred_check_branch
        %491 = sbr.rel (%p489) target = $region36
      $region35: #{dice_loss.1} parent=27 // pred_region
        _
      $region36: #{dice_loss.1} parent=27 // pred_fallthru
        _
      // Predicated region
      $region37: #{dice_loss.1} parent=27 // pred_check
        %p492 = pneg %p143
      $region38: #{dice_loss.1} parent=27 // pred_check_branch
        %494 = sbr.rel (%p492) target = $region40
      $region39: #{dice_loss.1} parent=27 // pred_region
        _
      $region40: #{dice_loss.1} parent=27 // pred_fallthru
        _
      // Predicated region
      $region41: #{dice_loss.1} parent=27 // pred_check
        %p495 = pneg %p171
      $region42: #{dice_loss.1} parent=27 // pred_check_branch
        %497 = sbr.rel (%p495) target = $region44
      $region43: #{dice_loss.1} parent=27 // pred_region
        _
      $region44: #{dice_loss.1} parent=27 // pred_fallthru
        _
    $region28: #{dice_loss.1} parent=5 // pred_fallthru
      _
    %p498 = scmp.le.s32.totalorder 2, %s11
    // Predicated region
    $region45: #{dice_loss.1} parent=5 // pred_check
      %p499 = pneg %p498
    $region46: #{dice_loss.1} parent=5 // pred_check_branch
      %501 = sbr.rel (%p499) target = $region48
    $region47: #{dice_loss.1} parent=5 // pred_region
      %s502 = ssub.s32 %s11, 2
      // Predicated region
      $region49: #{dice_loss.1} parent=47 // pred_check
        %p503 = pneg %p121
      $region50: #{dice_loss.1} parent=47 // pred_check_branch
        %505 = sbr.rel (%p503) target = $region52
      $region51: #{dice_loss.1} parent=47 // pred_region
        %p506 = scmp.lt.s32.totalorder %s24, 1
        %s507 = scalar_select %p506, %s24, 1
        %p508 = scmp.lt.s32.totalorder %s25, 0
        %s509 = scalar_select %p508, %s25, 0
        %s510 = sadd.s32 %s509, %s507
        %s511 = smul.addr %s510, 4
        %s512 = scalar_lea.vmem %s2, %s511
      $region52: #{dice_loss.1} parent=47 // pred_fallthru
        _
      // Predicated region
      $region53: #{dice_loss.1} parent=47 // pred_check
        %p513 = pneg %p149
      $region54: #{dice_loss.1} parent=47 // pred_check_branch
        %515 = sbr.rel (%p513) target = $region56
      $region55: #{dice_loss.1} parent=47 // pred_region
        %p516 = scmp.lt.s32.totalorder %s24, 1
        %s517 = scalar_select %p516, %s24, 1
        %p518 = scmp.lt.s32.totalorder %s25, 0
        %s519 = scalar_select %p518, %s25, 0
        %s520 = sadd.s32 %s519, %s517
        %s521 = smul.addr %s520, 4
        %s522 = scalar_lea.vmem %s3, %s521
      $region56: #{dice_loss.1} parent=47 // pred_fallthru
        _
      // Predicated region
      $region57: #{dice_loss.1} parent=47 // pred_check
        %p523 = pneg %p177
      $region58: #{dice_loss.1} parent=47 // pred_check_branch
        %525 = sbr.rel (%p523) target = $region60
      $region59: #{dice_loss.1} parent=47 // pred_region
        %p526 = scmp.lt.s32.totalorder %s24, 1
        %s527 = scalar_select %p526, %s24, 1
        %p528 = scmp.lt.s32.totalorder %s25, 0
        %s529 = scalar_select %p528, %s25, 0
        %s530 = sadd.s32 %s529, %s527
        %s531 = smul.addr %s530, 4
        %s532 = scalar_lea.vmem %s4, %s531
      $region60: #{dice_loss.1} parent=47 // pred_fallthru
        _
    $region48: #{dice_loss.1} parent=5 // pred_fallthru
      _
  $region6: #{dice_loss.1} parent=0 // loop_footer
    %s15 = sadd.s32 1, %s11
  $region7: #{dice_loss.1} parent=0 // loop_footer_branch
    %10 = sbr.rel target = $region3
  $region8: #{dice_loss.1} parent=0 // loop_exit
    _

</llo_original>
